<compile_context>
chip_gen: v7x
topology: tpu7x:2x2x1
jax: 0.10.0
libtpu: 0.0.40
codegen_flags: <defaults>
</compile_context>

<pallas_src>
import functools

import jax
import jax.numpy as jnp
from jax.experimental import pallas as pl
from jax.experimental.pallas import tpu as pltpu


# ---------------------------------------------------------------------------
# Kernel: all M machines lane-batched, complex-mean-log epilogue fused.
# ---------------------------------------------------------------------------
def _avg_net_kernel(x_ref, w1_ref, b1_ref, w2re_ref, w2im_ref,
                    b2re_ref, b2im_ref, out_ref, *, inv_m):
    # x:    (tb, N)    bf16 spin configurations (rows = batch of configs)
    # w1:   (N, M*H)   first layers of all machines packed along lanes
    # b1:   (1, M*H)
    # w2re: (M*H, M)   block-structured Re head (col m only sees rows m*H..)
    # w2im: (M*H, M)   block-structured Im head
    # b2re/b2im: (1, M)  second-layer bias + NormalisedMachine scale folded in
    # out:  (tb, 3)    [log|mean_m psi_m|, Re(mean*e^{-amax}), Im(mean*e^{-amax})]
    x = x_ref[...].astype(jnp.float32)                      # VPU cast, exact for +-1
    h = jnp.dot(x, w1_ref[...], preferred_element_type=jnp.float32)
    h = jnp.maximum(h + b1_ref[...], 0.0)
    a = jnp.dot(h, w2re_ref[...], preferred_element_type=jnp.float32) + b2re_ref[...]
    b = jnp.dot(h, w2im_ref[...], preferred_element_type=jnp.float32) + b2im_ref[...]
    # Fused, numerically stable complex mean over machines:
    #   mean_m exp(a_m + i b_m) = exp(a_max) * (re + i im)
    a_max = jnp.max(a, axis=1, keepdims=True)
    w = jnp.exp(a - a_max)
    re = jnp.sum(w * jnp.cos(b), axis=1, keepdims=True) * inv_m
    im = jnp.sum(w * jnp.sin(b), axis=1, keepdims=True) * inv_m
    log_mag = a_max + 0.5 * jnp.log(re * re + im * im)
    out_ref[...] = jnp.concatenate([log_mag, re, im], axis=1)


def _round_up(v, m):
    return ((v + m - 1) // m) * m


def _pick_batch_tile(B):
    # Large tiles amortise the ~0.35 us/grid-step overhead; for B >= 256 use
    # at least 2 tiles so the "parallel" batch axis can be split across both
    # v7x TensorCores (no-op on single-TC v5e/v6e).
    if B > 1024:
        return 1024
    if B >= 256:
        return _round_up((B + 1) // 2, 8)
    return _round_up(max(B, 1), 8)


# ---------------------------------------------------------------------------
# Builder: packs parameters ONCE and returns jitted forward wrappers.
# ---------------------------------------------------------------------------
def make_average_net(params):
    """Returns (forward, forward_batch) closing over pre-packed parameters."""
    w1, b1, w2, b2, scale = params
    M, n, H = w1.shape
    MH = M * H

    # (M, N, H) -> (N, M*H); column index = m*H + h.
    w1cat = jnp.transpose(w1, (1, 0, 2)).reshape(n, MH).astype(jnp.float32)
    b1cat = b1.reshape(1, MH).astype(jnp.float32)
    # Block-structured second layer split into Re / Im heads: (M*H, M) each.
    # TODO(synk): for large M this wastes MXU columns (O(M^2*H) work for
    # O(M*H) useful FLOPs); switch to a per-machine contraction or cap
    # machines-per-kernel when M grows.
    eye = jnp.eye(M, dtype=jnp.float32)
    w2re = (w2[:, :, 0].astype(jnp.float32)[:, :, None] * eye[:, None, :]).reshape(MH, M)
    w2im = (w2[:, :, 1].astype(jnp.float32)[:, :, None] * eye[:, None, :]).reshape(MH, M)
    bs = (b2 + scale).astype(jnp.float32)                    # scale folded into bias
    b2re = bs[:, 0, 0].reshape(1, M)
    b2im = bs[:, 0, 1].reshape(1, M)

    kernel = functools.partial(_avg_net_kernel, inv_m=1.0 / M)

    def _forward_logs(xb):                                   # (B, n) -> (B, 3)
        B = xb.shape[0]
        tb = _pick_batch_tile(B)
        Bp = _round_up(B, tb)
        xb = xb.astype(jnp.bfloat16)                         # +-1 spins exact in bf16
        # TODO(synk): on v5e/v6e x could go all the way to int8 (native int MXU);
        # v7x has no integer MXU path, so bf16 is the portable choice here.
        if Bp != B:
            xb = jnp.pad(xb, ((0, Bp - B), (0, 0)))
        out = pl.pallas_call(
            kernel,
            out_shape=jax.ShapeDtypeStruct((Bp, 3), jnp.float32),
            grid=(Bp // tb,),
            in_specs=[
                pl.BlockSpec((tb, n), lambda i: (i, 0)),     # x tile (batch rows)
                pl.BlockSpec((n, MH), lambda i: (0, 0)),     # packed W1 (shared)
                pl.BlockSpec((1, MH), lambda i: (0, 0)),     # packed b1 (shared)
                pl.BlockSpec((MH, M), lambda i: (0, 0)),     # W2 Re head
                pl.BlockSpec((MH, M), lambda i: (0, 0)),     # W2 Im head
                pl.BlockSpec((1, M), lambda i: (0, 0)),      # b2+scale (Re)
                pl.BlockSpec((1, M), lambda i: (0, 0)),      # b2+scale (Im)
            ],
            out_specs=pl.BlockSpec((tb, 3), lambda i: (i, 0)),
            compiler_params=pltpu.CompilerParams(
                dimension_semantics=("parallel",),           # batch rows independent
            ),
        )(xb, w1cat, b1cat, w2re, w2im, b2re, b2im)
        return out[:B]

    @jax.jit
    def forward_batch(xs):
        """xs (B, N) spin configs -> (B, 2) [Re, Im] of log(mean_m psi_m)."""
        ys = _forward_logs(xs.reshape(-1, n))
        log_re = ys[:, 0]
        log_im = jnp.arctan2(ys[:, 2], ys[:, 1])             # tiny glue: 2 scalars/row
        return jnp.stack([log_re, log_im], axis=1).astype(jnp.float32)

    @jax.jit
    def forward(x):
        """Single spin configuration -> (2,), matching AverageNet.forward."""
        return forward_batch(x.reshape(1, n))[0]

    return forward, forward_batch


# ---------------------------------------------------------------------------
# Pure-JAX reference (naive, exactly the original module's math).
# ---------------------------------------------------------------------------
def reference_forward_batch(xs, params):
    w1, b1, w2, b2, scale = params
    x2 = xs.astype(jnp.float32)                                      # (B, n)
    h = jnp.maximum(jnp.einsum("bn,mnh->mbh", x2, w1) + b1, 0.0)     # (M, B, H)
    y = jnp.einsum("mbh,mho->mbo", h, w2) + b2 + scale               # (M, B, 2)
    a = y[..., 0]
    b = y[..., 1]
    psi = jnp.exp(a) * (jnp.cos(b) + 1j * jnp.sin(b))                # (M, B) complex
    lg = jnp.log(jnp.mean(psi, axis=0))                              # (B,)
    return jnp.stack([jnp.real(lg), jnp.imag(lg)], axis=1).astype(jnp.float32)


def reference_forward(x, params):
    return reference_forward_batch(x.reshape(1, -1), params)[0]


if __name__ == "__main__":
    M, N_SPINS, HIDDEN = 4, 16, 32        # M*HIDDEN = 128 = one full vreg of lanes

    key = jax.random.PRNGKey(0)
    kx, kb, k1, k2, k3, k4, k5 = jax.random.split(key, 7)

    # Spin configuration(s) of +-1 (float32), as AverageNet.forward expects.
    x = jnp.where(jax.random.bernoulli(kx, 0.5, (N_SPINS,)), 1.0, -1.0)
    x = x.astype(jnp.float32)
    xs = jnp.where(jax.random.bernoulli(kb, 0.5, (384, N_SPINS)), 1.0, -1.0)
    xs = xs.astype(jnp.float32)

    # Deterministic synthetic "weights" for the M machines.
    w1 = 0.05 * jax.random.normal(k1, (M, N_SPINS, HIDDEN), jnp.float32)
    b1 = 0.05 * jax.random.normal(k2, (M, 1, HIDDEN), jnp.float32)
    w2 = 0.05 * jax.random.normal(k3, (M, HIDDEN, 2), jnp.float32)
    b2 = 0.05 * jax.random.normal(k4, (M, 1, 2), jnp.float32)
    scale = 0.01 * jax.random.normal(k5, (M, 1, 2), jnp.float32)
    params = (w1, b1, w2, b2, scale)

    # Pack parameters ONCE, get jitted forwards (hoisted out of the call path).
    forward, forward_batch = make_average_net(params)

    # Single-configuration forward (matches AverageNet.forward semantics).
    out = jax.block_until_ready(forward(x))
    ref = reference_forward(x, params)
    assert out.shape == (2,) and out.dtype == jnp.float32
    assert jnp.allclose(out, ref, atol=1e-4, rtol=1e-4), (out, ref)

    # Small batch (single tile, padded to 8 rows).
    outs_small = jax.block_until_ready(forward_batch(xs[:5]))
    refs_small = reference_forward_batch(xs[:5], params)
    assert outs_small.shape == (5, 2) and outs_small.dtype == jnp.float32
    assert jnp.allclose(outs_small, refs_small, atol=1e-4, rtol=1e-4), (outs_small, refs_small)

    # Larger batch: exercises the >=2-tile "parallel" grid path (v7x 2 TCs).
    outs = jax.block_until_ready(forward_batch(xs))
    refs = reference_forward_batch(xs, params)
    assert outs.shape == (384, 2) and outs.dtype == jnp.float32
    assert jnp.allclose(outs, refs, atol=1e-4, rtol=1e-4), (outs, refs)

    print("KERNEL_OK")
</pallas_src>

<mosaic_0001>
module attributes {stable_mosaic.version = 11 : i64} {
  func.func @_avg_net_kernel(%arg0: i32, %arg1: memref<8x16xbf16, #tpu.memory_space<vmem>>, %arg2: memref<16x128xf32, #tpu.memory_space<vmem>>, %arg3: memref<1x128xf32, #tpu.memory_space<vmem>>, %arg4: memref<128x4xf32, #tpu.memory_space<vmem>>, %arg5: memref<128x4xf32, #tpu.memory_space<vmem>>, %arg6: memref<1x4xf32, #tpu.memory_space<vmem>>, %arg7: memref<1x4xf32, #tpu.memory_space<vmem>>, %arg8: memref<8x3xf32, #tpu.memory_space<vmem>>) attributes {dimension_semantics = [#tpu.dimension_semantics<parallel>], iteration_bounds = array<i64: 1>, scalar_prefetch = 0 : i64, scratch_operands = 0 : i64, tpu.core_type = #tpu.core_type<tc>, window_params = [{transform_indices = @transform_0, window_bounds = array<i64: 8, 16>}, {pipeline_mode = #tpu.pipeline_mode<synchronous>, transform_indices = @transform_1, window_bounds = array<i64: 16, 128>}, {pipeline_mode = #tpu.pipeline_mode<synchronous>, transform_indices = @transform_2, window_bounds = array<i64: 1, 128>}, {pipeline_mode = #tpu.pipeline_mode<synchronous>, transform_indices = @transform_3, window_bounds = array<i64: 128, 4>}, {pipeline_mode = #tpu.pipeline_mode<synchronous>, transform_indices = @transform_4, window_bounds = array<i64: 128, 4>}, {pipeline_mode = #tpu.pipeline_mode<synchronous>, transform_indices = @transform_5, window_bounds = array<i64: 1, 4>}, {pipeline_mode = #tpu.pipeline_mode<synchronous>, transform_indices = @transform_6, window_bounds = array<i64: 1, 4>}, {transform_indices = @transform_7, window_bounds = array<i64: 8, 3>}]} {
    %c0 = arith.constant 0 : index
    %c0_0 = arith.constant 0 : index
    %0 = vector.load %arg1[%c0, %c0_0] : memref<8x16xbf16, #tpu.memory_space<vmem>>, vector<8x16xbf16>
    %1 = arith.extf %0 : vector<8x16xbf16> to vector<8x16xf32>
    %c0_1 = arith.constant 0 : index
    %c0_2 = arith.constant 0 : index
    %2 = vector.load %arg2[%c0_1, %c0_2] : memref<16x128xf32, #tpu.memory_space<vmem>>, vector<16x128xf32>
    %cst = arith.constant dense<0.000000e+00> : vector<8x128xf32>
    %3 = tpu.matmul %1, %2, %cst {dimension_numbers = #tpu.dot_dimension_numbers<[1], [0], [0], [1], [0, 0, 1, 1], [], []>} : vector<8x16xf32>, vector<16x128xf32>, vector<8x128xf32> -> vector<8x128xf32>
    %c0_3 = arith.constant 0 : index
    %c0_4 = arith.constant 0 : index
    %4 = vector.load %arg3[%c0_3, %c0_4] : memref<1x128xf32, #tpu.memory_space<vmem>>, vector<1x128xf32>
    %5 = vector.broadcast %4 : vector<1x128xf32> to vector<8x128xf32>
    %6 = arith.addf %3, %5 : vector<8x128xf32>
    %cst_5 = arith.constant 0.000000e+00 : f32
    %7 = vector.broadcast %cst_5 : f32 to vector<8x128xf32>
    %8 = arith.maximumf %6, %7 : vector<8x128xf32>
    %c0_6 = arith.constant 0 : index
    %c0_7 = arith.constant 0 : index
    %9 = vector.load %arg4[%c0_6, %c0_7] : memref<128x4xf32, #tpu.memory_space<vmem>>, vector<128x4xf32>
    %cst_8 = arith.constant dense<0.000000e+00> : vector<8x4xf32>
    %10 = tpu.matmul %8, %9, %cst_8 {dimension_numbers = #tpu.dot_dimension_numbers<[1], [0], [0], [1], [0, 0, 1, 1], [], []>} : vector<8x128xf32>, vector<128x4xf32>, vector<8x4xf32> -> vector<8x4xf32>
    %c0_9 = arith.constant 0 : index
    %c0_10 = arith.constant 0 : index
    %11 = vector.load %arg6[%c0_9, %c0_10] : memref<1x4xf32, #tpu.memory_space<vmem>>, vector<1x4xf32>
    %12 = vector.broadcast %11 : vector<1x4xf32> to vector<8x4xf32>
    %13 = arith.addf %10, %12 : vector<8x4xf32>
    %c0_11 = arith.constant 0 : index
    %c0_12 = arith.constant 0 : index
    %14 = vector.load %arg5[%c0_11, %c0_12] : memref<128x4xf32, #tpu.memory_space<vmem>>, vector<128x4xf32>
    %cst_13 = arith.constant dense<0.000000e+00> : vector<8x4xf32>
    %15 = tpu.matmul %8, %14, %cst_13 {dimension_numbers = #tpu.dot_dimension_numbers<[1], [0], [0], [1], [0, 0, 1, 1], [], []>} : vector<8x128xf32>, vector<128x4xf32>, vector<8x4xf32> -> vector<8x4xf32>
    %c0_14 = arith.constant 0 : index
    %c0_15 = arith.constant 0 : index
    %16 = vector.load %arg7[%c0_14, %c0_15] : memref<1x4xf32, #tpu.memory_space<vmem>>, vector<1x4xf32>
    %17 = vector.broadcast %16 : vector<1x4xf32> to vector<8x4xf32>
    %18 = arith.addf %15, %17 : vector<8x4xf32>
    %cst_16 = arith.constant dense<0xFF800000> : vector<8xf32>
    %19 = vector.multi_reduction <maximumf>, %13, %cst_16 [1] : vector<8x4xf32> to vector<8xf32>
    %20 = vector.shape_cast %19 : vector<8xf32> to vector<8x1xf32>
    %21 = vector.broadcast %20 : vector<8x1xf32> to vector<8x4xf32>
    %22 = arith.subf %13, %21 : vector<8x4xf32>
    %23 = math.exp %22 : vector<8x4xf32>
    %24 = math.cos %18 : vector<8x4xf32>
    %25 = arith.mulf %23, %24 : vector<8x4xf32>
    %cst_17 = arith.constant dense<0.000000e+00> : vector<8xf32>
    %26 = vector.multi_reduction <add>, %25, %cst_17 [1] : vector<8x4xf32> to vector<8xf32>
    %27 = vector.shape_cast %26 : vector<8xf32> to vector<8x1xf32>
    %cst_18 = arith.constant 2.500000e-01 : f32
    %28 = vector.broadcast %cst_18 : f32 to vector<8x1xf32>
    %29 = arith.mulf %27, %28 : vector<8x1xf32>
    %30 = math.sin %18 : vector<8x4xf32>
    %31 = arith.mulf %23, %30 : vector<8x4xf32>
    %cst_19 = arith.constant dense<0.000000e+00> : vector<8xf32>
    %32 = vector.multi_reduction <add>, %31, %cst_19 [1] : vector<8x4xf32> to vector<8xf32>
    %33 = vector.shape_cast %32 : vector<8xf32> to vector<8x1xf32>
    %cst_20 = arith.constant 2.500000e-01 : f32
    %34 = vector.broadcast %cst_20 : f32 to vector<8x1xf32>
    %35 = arith.mulf %33, %34 : vector<8x1xf32>
    %36 = arith.mulf %29, %29 : vector<8x1xf32>
    %37 = arith.mulf %35, %35 : vector<8x1xf32>
    %38 = arith.addf %36, %37 : vector<8x1xf32>
    %39 = math.log %38 : vector<8x1xf32>
    %cst_21 = arith.constant 5.000000e-01 : f32
    %40 = vector.broadcast %cst_21 : f32 to vector<8x1xf32>
    %41 = arith.mulf %40, %39 : vector<8x1xf32>
    %42 = arith.addf %20, %41 : vector<8x1xf32>
    %43 = tpu.concatenate %42, %29, %35 in 1 : vector<8x1xf32>, vector<8x1xf32>, vector<8x1xf32> -> vector<8x3xf32>
    %c0_22 = arith.constant 0 : index
    %c0_23 = arith.constant 0 : index
    %44 = vector.load %arg8[%c0_22, %c0_23] : memref<8x3xf32, #tpu.memory_space<vmem>>, vector<8x3xf32>
    tpu.vector_store %arg8[%c0_22, %c0_23], %43 {strides = array<i32>} : memref<8x3xf32, #tpu.memory_space<vmem>>, vector<8x3xf32>,
    return
  }
  func.func @transform_0(%arg0: i32) -> (i32, i32) {
    %c0_i32 = arith.constant 0 : i32
    %c0_i32_0 = arith.constant 0 : i32
    return %arg0, %c0_i32 : i32, i32
  }
  func.func @transform_1(%arg0: i32) -> (i32, i32) {
    %c0_i32 = arith.constant 0 : i32
    %c0_i32_0 = arith.constant 0 : i32
    %c0_i32_1 = arith.constant 0 : i32
    return %c0_i32, %c0_i32_0 : i32, i32
  }
  func.func @transform_2(%arg0: i32) -> (i32, i32) {
    %c0_i32 = arith.constant 0 : i32
    %c0_i32_0 = arith.constant 0 : i32
    %c0_i32_1 = arith.constant 0 : i32
    return %c0_i32, %c0_i32_0 : i32, i32
  }
  func.func @transform_3(%arg0: i32) -> (i32, i32) {
    %c0_i32 = arith.constant 0 : i32
    %c0_i32_0 = arith.constant 0 : i32
    %c0_i32_1 = arith.constant 0 : i32
    return %c0_i32, %c0_i32_0 : i32, i32
  }
  func.func @transform_4(%arg0: i32) -> (i32, i32) {
    %c0_i32 = arith.constant 0 : i32
    %c0_i32_0 = arith.constant 0 : i32
    %c0_i32_1 = arith.constant 0 : i32
    return %c0_i32, %c0_i32_0 : i32, i32
  }
  func.func @transform_5(%arg0: i32) -> (i32, i32) {
    %c0_i32 = arith.constant 0 : i32
    %c0_i32_0 = arith.constant 0 : i32
    %c0_i32_1 = arith.constant 0 : i32
    return %c0_i32, %c0_i32_0 : i32, i32
  }
  func.func @transform_6(%arg0: i32) -> (i32, i32) {
    %c0_i32 = arith.constant 0 : i32
    %c0_i32_0 = arith.constant 0 : i32
    %c0_i32_1 = arith.constant 0 : i32
    return %c0_i32, %c0_i32_0 : i32, i32
  }
  func.func @transform_7(%arg0: i32) -> (i32, i32) {
    %c0_i32 = arith.constant 0 : i32
    %c0_i32_0 = arith.constant 0 : i32
    return %arg0, %c0_i32 : i32, i32
  }
}

</mosaic_0001>

<llo_original>
// kernel: forward_batch.1
$region0: #{forward_batch.1}
  #allocation0 [shape = 'u32[]', space=smem, size = 0x4, offset = 0x4, fixed_abs, tag = 'smem constant byte address 0x4 - core index']
  #allocation1 [shape = 'u32[144,128]{1,0:T(1,128)}', space=vmem, size = 0x12000, scoped, tag = 'internal scratch']
  %s0 = inlined_call_operand.vmem [shape: bf16[8,16], index: 0, kind: input, shape index: {}]
  %s1 = inlined_call_operand.hbm [shape: f32[16,128], index: 1, kind: input, shape index: {}]
  %s2 = inlined_call_operand.vmem [shape: f32[1,128], index: 2, kind: input, shape index: {}]
  %s3 = inlined_call_operand.hbm [shape: f32[128,4], index: 3, kind: input, shape index: {}]
  %s4 = inlined_call_operand.hbm [shape: f32[128,4], index: 4, kind: input, shape index: {}]
  %s5 = inlined_call_operand.vmem [shape: f32[1,4], index: 5, kind: input, shape index: {}]
  %s6 = inlined_call_operand.vmem [shape: f32[1,4], index: 6, kind: input, shape index: {}]
  %s7 = inlined_call_operand.vmem [shape: f32[8,3], index: 7, kind: output, shape index: {}]
  %s8 = sld [smem:[#allocation0]]
  $region50: #{forward_batch.1} parent=0
    _
  %s10 = ssub.s32 1, %s8
  %s11 = scalar_select 0, %s10, %s8
  $region1: #{forward_batch.1} parent=0
    #allocation2 [shape = 'u8[8192]{0}', space=vmem, size = 0x2000, scoped, tag = 'input window, operand 1, single buffered']
    #allocation3 [shape = 's32[1]{0}', space=sflag, size = 0x4, scoped, tag = 'scoped memory for forward_batch.1']
    #allocation4 [shape = 'u8[65536]{0}', space=vmem, size = 0x10000, scoped, tag = 'input window, operand 3, single buffered']
    #allocation5 [shape = 's32[1]{0}', space=sflag, size = 0x4, scoped, tag = 'scoped memory for forward_batch.1']
    #allocation6 [shape = 'u8[65536]{0}', space=vmem, size = 0x10000, scoped, tag = 'input window, operand 4, single buffered']
    %12 = vsyncpa [#allocation3], 0
    %13 = vsyncpa [#allocation5], 0
    // Predicated region
    $region2: #{forward_batch.1} parent=1 // pred_check
      _
    $region3: #{forward_batch.1} parent=1 // pred_check_branch
      %15 = sbr.rel (0) target = $region5
    $region4: #{forward_batch.1} parent=1 // pred_region
      _
    $region5: #{forward_batch.1} parent=1 // pred_fallthru
      _
    // Predicated region
    $region6: #{forward_batch.1} parent=1 // pred_check
      _
    $region7: #{forward_batch.1} parent=1 // pred_check_branch
      %17 = sbr.rel (0) target = $region9
    $region8: #{forward_batch.1} parent=1 // pred_region
      %s19 = ssub.s32 256, 256
      %20 = vsyncadd [#allocation3], %s19
      %s21 = sshll.u32 [#allocation2], 4
      %s22 = int_to_ptr.vmem [resolvable:$true] %s21
      %27 = dma.hbm_to_vmem [thread:$0]  %s1, 256, %s22, [#allocation3], 128, 128, 8
    $region9: #{forward_batch.1} parent=1 // pred_fallthru
      _
    // Predicated region
    $region10: #{forward_batch.1} parent=1 // pred_check
      _
    $region11: #{forward_batch.1} parent=1 // pred_check_branch
      %29 = sbr.rel (0) target = $region13
    $region12: #{forward_batch.1} parent=1 // pred_region
      _
    $region13: #{forward_batch.1} parent=1 // pred_fallthru
      _
    // Predicated region
    $region14: #{forward_batch.1} parent=1 // pred_check
      _
    $region15: #{forward_batch.1} parent=1 // pred_check_branch
      %31 = sbr.rel (0) target = $region17
    $region16: #{forward_batch.1} parent=1 // pred_region
      %s33 = ssub.s32 2048, 2048
      %34 = vsyncadd [#allocation5], %s33
      %s35 = sshll.u32 [#allocation4], 4
      %s36 = int_to_ptr.vmem [resolvable:$true] %s35
      %41 = dma.hbm_to_vmem [thread:$0]  %s3, 2048, %s36, [#allocation5], 128, 128, 8
    $region17: #{forward_batch.1} parent=1 // pred_fallthru
      _
    // Predicated region
    $region18: #{forward_batch.1} parent=1 // pred_check
      _
    $region19: #{forward_batch.1} parent=1 // pred_check_branch
      %43 = sbr.rel (0) target = $region21
    $region20: #{forward_batch.1} parent=1 // pred_region
      %s45 = ssub.s32 2048, 2048
      %46 = vsyncadd [#allocation5], %s45
      %s47 = sshll.u32 [#allocation6], 4
      %s48 = int_to_ptr.vmem [resolvable:$true] %s47
      %53 = dma.hbm_to_vmem [thread:$0]  %s4, 2048, %s48, [#allocation5], 128, 128, 8
    $region21: #{forward_batch.1} parent=1 // pred_fallthru
      _
    // Predicated region
    $region22: #{forward_batch.1} parent=1 // pred_check
      _
    $region23: #{forward_batch.1} parent=1 // pred_check_branch
      %55 = sbr.rel (0) target = $region25
    $region24: #{forward_batch.1} parent=1 // pred_region
      _
    $region25: #{forward_batch.1} parent=1 // pred_fallthru
      _
    // Predicated region
    $region26: #{forward_batch.1} parent=1 // pred_check
      _
    $region27: #{forward_batch.1} parent=1 // pred_check_branch
      %57 = sbr.rel (0) target = $region29
    $region28: #{forward_batch.1} parent=1 // pred_region
      _
    $region29: #{forward_batch.1} parent=1 // pred_fallthru
      _
    // Predicated region
    $region30: #{forward_batch.1} parent=1 // pred_check
      _
    $region31: #{forward_batch.1} parent=1 // pred_check_branch
      %59 = sbr.rel (0) target = $region33
    $region32: #{forward_batch.1} parent=1 // pred_region
      %60 = dma.done [#allocation3], 256
    $region33: #{forward_batch.1} parent=1 // pred_fallthru
      _
    // Predicated region
    $region34: #{forward_batch.1} parent=1 // pred_check
      _
    $region35: #{forward_batch.1} parent=1 // pred_check_branch
      %62 = sbr.rel (0) target = $region37
    $region36: #{forward_batch.1} parent=1 // pred_region
      %63 = dma.done [#allocation5], 2048
    $region37: #{forward_batch.1} parent=1 // pred_fallthru
      _
    // Predicated region
    $region38: #{forward_batch.1} parent=1 // pred_check
      _
    $region39: #{forward_batch.1} parent=1 // pred_check_branch
      %65 = sbr.rel (0) target = $region41
    $region40: #{forward_batch.1} parent=1 // pred_region
      %66 = dma.done [#allocation5], 2048
    $region41: #{forward_batch.1} parent=1 // pred_fallthru
      _
    %v67 = vld [vmem:[%s0] sm:$0xf]
    %v68 = vunpack.c.l.bf16 %v67
    %v69 = vld [vmem:[#allocation2] sm:$0xff]
    %v70 = vld [vmem:[#allocation2 + $0x8] sm:$0xff]
    %v71 = vld [vmem:[%s2] sm:$0x1]
    %v73 = vlaneseq
    %v74 = vshrl.u32 %v73, 7
    %v75 = vsub.s32 0, %v74
    %v76 = vrot.slane %v71, %v75
    %vm78 = vcmask 130048
    %v80 = vsel %vm78, %v68, 0
    %82 = vmatprep.subr.mxu0 0.0
    %83 = vmatpush1.msra.mxu0 %v69
    %84 = vmatprep.subr.mxu0 0.0
    %85 = vmatpush1.msra.mxu0 %v70
    %86 = vmatprep.subr.mxu0 0.0
    %87 = vmatpush1.msra.mxu0 0.0
    %88 = vmatprep.subr.mxu0 0.0
    %89 = vmatpush1.msra.mxu0 0.0
    %90 = vmatprep.subr.mxu0 0.0
    %91 = vmatpush1.msra.mxu0 0.0
    %92 = vmatprep.subr.mxu0 0.0
    %93 = vmatpush1.msra.mxu0 0.0
    %94 = vmatprep.subr.mxu0 0.0
    %95 = vmatpush1.msra.mxu0 0.0
    %96 = vmatprep.subr.mxu0 0.0
    %97 = vmatpush1.msra.mxu0 0.0
    %98 = vmatprep.subr.mxu0 0.0
    %99 = vmatpush1.msra.mxu0 0.0
    %100 = vmatprep.subr.mxu0 0.0
    %101 = vmatpush1.msra.mxu0 0.0
    %102 = vmatprep.subr.mxu0 0.0
    %103 = vmatpush1.msra.mxu0 0.0
    %104 = vmatprep.subr.mxu0 0.0
    %105 = vmatpush1.msra.mxu0 0.0
    %106 = vmatprep.subr.mxu0 0.0
    %107 = vmatpush1.msra.mxu0 0.0
    %108 = vmatprep.subr.mxu0 0.0
    %109 = vmatpush1.msra.mxu0 0.0
    %110 = vmatprep.subr.mxu0 0.0
    %111 = vmatpush1.msra.mxu0 0.0
    %112 = vmatprep.subr.mxu0 0.0
    %113 = vmatpush1.msra.mxu0 0.0
    %114 = vmatprep.subr.mxu0 0.0
    %115 = vmatpush1.msra.mxu0 0.0
    %116 = vmatprep.subr.mxu0 0.0
    %117 = vmatpush1.msra.mxu0 0.0
    %118 = vmatprep.subr.mxu0 0.0
    %119 = vmatpush1.msra.mxu0 0.0
    %120 = vmatprep.subr.mxu0 0.0
    %121 = vmatpush1.msra.mxu0 0.0
    %122 = vmatprep.subr.mxu0 0.0
    %123 = vmatpush1.msra.mxu0 0.0
    %124 = vmatprep.subr.mxu0 0.0
    %125 = vmatpush1.msra.mxu0 0.0
    %126 = vmatprep.subr.mxu0 0.0
    %127 = vmatpush1.msra.mxu0 0.0
    %128 = vmatprep.subr.mxu0 0.0
    %129 = vmatpush1.msra.mxu0 0.0
    %130 = vmatprep.subr.mxu0 0.0
    %131 = vmatpush1.msra.mxu0 0.0
    %132 = vmatprep.subr.mxu0 0.0
    %133 = vmatpush1.msra.mxu0 0.0
    %134 = vmatprep.subr.mxu0 0.0
    %135 = vmatpush1.msra.mxu0 0.0
    %136 = vmatprep.subr.mxu0 0.0
    %137 = vmatpush1.msra.mxu0 0.0
    %138 = vmatprep.subr.mxu0 0.0
    %139 = vmatpush1.msra.mxu0 0.0
    %140 = vmatprep.subr.mxu0 0.0
    %141 = vmatpush1.msra.mxu0 0.0
    %142 = vmatprep.subr.mxu0 0.0
    %143 = vmatpush1.msra.mxu0 0.0
    %144 = vmatprep.subr.mxu0 0.0
    %145 = vmatpush1.msra.mxu0 0.0
    %146 = vmatprep.mubr.f32.mxu0 0.0
    %147 = vmatmul.mubr.f32.gmra.mrb[0].mxu0 %v80
    %v148 = vpop.f32.mrb[0].mxu0
    %v149 = vadd.f32 %v76, %v148
    %v150 = vpop.f32.mrb[0].mxu0
    %151 = vdwg.mxu0
    %v152 = vmax.f32 %v149, 0.0
    %v153 = vld [vmem:[#allocation4] sm:$0xff]
    %v154 = vld [vmem:[#allocation4 + $0x8] sm:$0xff]
    %v155 = vld [vmem:[#allocation4 + $0x10] sm:$0xff]
    %v156 = vld [vmem:[#allocation4 + $0x18] sm:$0xff]
    %v157 = vld [vmem:[#allocation4 + $0x20] sm:$0xff]
    %v158 = vld [vmem:[#allocation4 + $0x28] sm:$0xff]
    %v159 = vld [vmem:[#allocation4 + $0x30] sm:$0xff]
    %v160 = vld [vmem:[#allocation4 + $0x38] sm:$0xff]
    %v161 = vld [vmem:[#allocation4 + $0x40] sm:$0xff]
    %v162 = vld [vmem:[#allocation4 + $0x48] sm:$0xff]
    %v163 = vld [vmem:[#allocation4 + $0x50] sm:$0xff]
    %v164 = vld [vmem:[#allocation4 + $0x58] sm:$0xff]
    %v165 = vld [vmem:[#allocation4 + $0x60] sm:$0xff]
    %v166 = vld [vmem:[#allocation4 + $0x68] sm:$0xff]
    %v167 = vld [vmem:[#allocation4 + $0x70] sm:$0xff]
    %v168 = vld [vmem:[#allocation4 + $0x78] sm:$0xff]
    %v169 = vld [vmem:[%s5] sm:$0x1]
    %v171 = vlaneseq
    %v172 = vshrl.u32 %v171, 7
    %v173 = vsub.s32 0, %v172
    %v174 = vrot.slane %v169, %v173
    %176 = vmatprep.subr.mxu0 0.0
    %177 = vmatpush1.msra.mxu0 %v153
    %178 = vmatprep.subr.mxu0 0.0
    %179 = vmatpush1.msra.mxu0 %v154
    %180 = vmatprep.subr.mxu0 0.0
    %181 = vmatpush1.msra.mxu0 %v155
    %182 = vmatprep.subr.mxu0 0.0
    %183 = vmatpush1.msra.mxu0 %v156
    %184 = vmatprep.subr.mxu0 0.0
    %185 = vmatpush1.msra.mxu0 %v157
    %186 = vmatprep.subr.mxu0 0.0
    %187 = vmatpush1.msra.mxu0 %v158
    %188 = vmatprep.subr.mxu0 0.0
    %189 = vmatpush1.msra.mxu0 %v159
    %190 = vmatprep.subr.mxu0 0.0
    %191 = vmatpush1.msra.mxu0 %v160
    %192 = vmatprep.subr.mxu0 0.0
    %193 = vmatpush1.msra.mxu0 %v161
    %194 = vmatprep.subr.mxu0 0.0
    %195 = vmatpush1.msra.mxu0 %v162
    %196 = vmatprep.subr.mxu0 0.0
    %197 = vmatpush1.msra.mxu0 %v163
    %198 = vmatprep.subr.mxu0 0.0
    %199 = vmatpush1.msra.mxu0 %v164
    %200 = vmatprep.subr.mxu0 0.0
    %201 = vmatpush1.msra.mxu0 %v165
    %202 = vmatprep.subr.mxu0 0.0
    %203 = vmatpush1.msra.mxu0 %v166
    %204 = vmatprep.subr.mxu0 0.0
    %205 = vmatpush1.msra.mxu0 %v167
    %206 = vmatprep.subr.mxu0 0.0
    %207 = vmatpush1.msra.mxu0 %v168
    %208 = vmatprep.subr.mxu0 0.0
    %209 = vmatpush1.msra.mxu0 0.0
    %210 = vmatprep.subr.mxu0 0.0
    %211 = vmatpush1.msra.mxu0 0.0
    %212 = vmatprep.subr.mxu0 0.0
    %213 = vmatpush1.msra.mxu0 0.0
    %214 = vmatprep.subr.mxu0 0.0
    %215 = vmatpush1.msra.mxu0 0.0
    %216 = vmatprep.subr.mxu0 0.0
    %217 = vmatpush1.msra.mxu0 0.0
    %218 = vmatprep.subr.mxu0 0.0
    %219 = vmatpush1.msra.mxu0 0.0
    %220 = vmatprep.subr.mxu0 0.0
    %221 = vmatpush1.msra.mxu0 0.0
    %222 = vmatprep.subr.mxu0 0.0
    %223 = vmatpush1.msra.mxu0 0.0
    %224 = vmatprep.subr.mxu0 0.0
    %225 = vmatpush1.msra.mxu0 0.0
    %226 = vmatprep.subr.mxu0 0.0
    %227 = vmatpush1.msra.mxu0 0.0
    %228 = vmatprep.subr.mxu0 0.0
    %229 = vmatpush1.msra.mxu0 0.0
    %230 = vmatprep.subr.mxu0 0.0
    %231 = vmatpush1.msra.mxu0 0.0
    %232 = vmatprep.subr.mxu0 0.0
    %233 = vmatpush1.msra.mxu0 0.0
    %234 = vmatprep.subr.mxu0 0.0
    %235 = vmatpush1.msra.mxu0 0.0
    %236 = vmatprep.subr.mxu0 0.0
    %237 = vmatpush1.msra.mxu0 0.0
    %238 = vmatprep.subr.mxu0 0.0
    %239 = vmatpush1.msra.mxu0 0.0
    %240 = vmatprep.mubr.f32.mxu0 0.0
    %241 = vmatmul.mubr.f32.gmra.mrb[0].mxu0 %v152
    %v242 = vpop.f32.mrb[0].mxu0
    %v243 = vadd.f32 %v174, %v242
    %v244 = vpop.f32.mrb[0].mxu0
    %245 = vdwg.mxu0
    %v246 = vld [vmem:[#allocation6] sm:$0xff]
    %v247 = vld [vmem:[#allocation6 + $0x8] sm:$0xff]
    %v248 = vld [vmem:[#allocation6 + $0x10] sm:$0xff]
    %v249 = vld [vmem:[#allocation6 + $0x18] sm:$0xff]
    %v250 = vld [vmem:[#allocation6 + $0x20] sm:$0xff]
    %v251 = vld [vmem:[#allocation6 + $0x28] sm:$0xff]
    %v252 = vld [vmem:[#allocation6 + $0x30] sm:$0xff]
    %v253 = vld [vmem:[#allocation6 + $0x38] sm:$0xff]
    %v254 = vld [vmem:[#allocation6 + $0x40] sm:$0xff]
    %v255 = vld [vmem:[#allocation6 + $0x48] sm:$0xff]
    %v256 = vld [vmem:[#allocation6 + $0x50] sm:$0xff]
    %v257 = vld [vmem:[#allocation6 + $0x58] sm:$0xff]
    %v258 = vld [vmem:[#allocation6 + $0x60] sm:$0xff]
    %v259 = vld [vmem:[#allocation6 + $0x68] sm:$0xff]
    %v260 = vld [vmem:[#allocation6 + $0x70] sm:$0xff]
    %v261 = vld [vmem:[#allocation6 + $0x78] sm:$0xff]
    %v262 = vld [vmem:[%s6] sm:$0x1]
    %v264 = vlaneseq
    %v265 = vshrl.u32 %v264, 7
    %v266 = vsub.s32 0, %v265
    %v267 = vrot.slane %v262, %v266
    %269 = vmatprep.subr.mxu0 0.0
    %270 = vmatpush1.msra.mxu0 %v246
    %271 = vmatprep.subr.mxu0 0.0
    %272 = vmatpush1.msra.mxu0 %v247
    %273 = vmatprep.subr.mxu0 0.0
    %274 = vmatpush1.msra.mxu0 %v248
    %275 = vmatprep.subr.mxu0 0.0
    %276 = vmatpush1.msra.mxu0 %v249
    %277 = vmatprep.subr.mxu0 0.0
    %278 = vmatpush1.msra.mxu0 %v250
    %279 = vmatprep.subr.mxu0 0.0
    %280 = vmatpush1.msra.mxu0 %v251
    %281 = vmatprep.subr.mxu0 0.0
    %282 = vmatpush1.msra.mxu0 %v252
    %283 = vmatprep.subr.mxu0 0.0
    %284 = vmatpush1.msra.mxu0 %v253
    %285 = vmatprep.subr.mxu0 0.0
    %286 = vmatpush1.msra.mxu0 %v254
    %287 = vmatprep.subr.mxu0 0.0
    %288 = vmatpush1.msra.mxu0 %v255
    %289 = vmatprep.subr.mxu0 0.0
    %290 = vmatpush1.msra.mxu0 %v256
    %291 = vmatprep.subr.mxu0 0.0
    %292 = vmatpush1.msra.mxu0 %v257
    %293 = vmatprep.subr.mxu0 0.0
    %294 = vmatpush1.msra.mxu0 %v258
    %295 = vmatprep.subr.mxu0 0.0
    %296 = vmatpush1.msra.mxu0 %v259
    %297 = vmatprep.subr.mxu0 0.0
    %298 = vmatpush1.msra.mxu0 %v260
    %299 = vmatprep.subr.mxu0 0.0
    %300 = vmatpush1.msra.mxu0 %v261
    %301 = vmatprep.subr.mxu0 0.0
    %302 = vmatpush1.msra.mxu0 0.0
    %303 = vmatprep.subr.mxu0 0.0
    %304 = vmatpush1.msra.mxu0 0.0
    %305 = vmatprep.subr.mxu0 0.0
    %306 = vmatpush1.msra.mxu0 0.0
    %307 = vmatprep.subr.mxu0 0.0
    %308 = vmatpush1.msra.mxu0 0.0
    %309 = vmatprep.subr.mxu0 0.0
    %310 = vmatpush1.msra.mxu0 0.0
    %311 = vmatprep.subr.mxu0 0.0
    %312 = vmatpush1.msra.mxu0 0.0
    %313 = vmatprep.subr.mxu0 0.0
    %314 = vmatpush1.msra.mxu0 0.0
    %315 = vmatprep.subr.mxu0 0.0
    %316 = vmatpush1.msra.mxu0 0.0
    %317 = vmatprep.subr.mxu0 0.0
    %318 = vmatpush1.msra.mxu0 0.0
    %319 = vmatprep.subr.mxu0 0.0
    %320 = vmatpush1.msra.mxu0 0.0
    %321 = vmatprep.subr.mxu0 0.0
    %322 = vmatpush1.msra.mxu0 0.0
    %323 = vmatprep.subr.mxu0 0.0
    %324 = vmatpush1.msra.mxu0 0.0
    %325 = vmatprep.subr.mxu0 0.0
    %326 = vmatpush1.msra.mxu0 0.0
    %327 = vmatprep.subr.mxu0 0.0
    %328 = vmatpush1.msra.mxu0 0.0
    %329 = vmatprep.subr.mxu0 0.0
    %330 = vmatpush1.msra.mxu0 0.0
    %331 = vmatprep.subr.mxu0 0.0
    %332 = vmatpush1.msra.mxu0 0.0
    %333 = vmatprep.mubr.f32.mxu0 0.0
    %334 = vmatmul.mubr.f32.gmra.mrb[0].mxu0 %v152
    %v335 = vpop.f32.mrb[0].mxu0
    %v336 = vadd.f32 %v267, %v335
    %v337 = vpop.f32.mrb[0].mxu0
    %338 = vdwg.mxu0
    %vm339 = vcmask 31744
    %v340 = vsel %vm339, %v243, -inf
    %341 = vmax.xlane.f32.xlu0 %v340
    %v342 = vpop.xlane.xlu0 %341
    %v343 = vsub.f32 %v243, %v342
    %v344 = vmul.f32 %v343, 1.442695
    %v345 = vpow.pop %v344
    %v346 = vand.u32 2147483647, %v336
    %vm347 = vcmp.le.f32.partialorder %v346, 0.7853982
    %vm348 = vcmp.lt.s32.totalorder %v336, 0
    %v349 = vand.u32 %v336, 2139095040
    %v350 = vshrl.u32 %v349, 23
    %v351 = vsub.s32 %v350, 127
    %v352 = vand.u32 2147483647, %v336
    %v353 = vand.u32 %v352, 8388607
    %v354 = vor.u32 %v353, 8388608
    %v355 = vsub.s32 0, %v354
    %v356 = vadd.s32 %v351, 1
    %vm357 = vcmp.gt.s32.totalorder %v356, 0
    %v358 = vsel %vm357, %v356, 0
    %v359 = vshrl.u32 %v358, 5
    %v360 = vand.u32 %v358, 31
    %v361 = vsub.s32 32, %v360
    %v362 = vshrl.u32 683565275, %v361
    %v363 = vshll.u32 683565275, %v360
    %v364 = vshrl.u32 2475754826, %v361
    %v365 = vor.u32 %v363, %v364
    %v366 = vshll.u32 2475754826, %v360
    %v367 = vshrl.u32 2131351028, %v361
    %v368 = vor.u32 %v366, %v367
    %v369 = vshll.u32 2131351028, %v360
    %v370 = vshrl.u32 2102212464, %v361
    %v371 = vor.u32 %v369, %v370
    %v372 = vshll.u32 2102212464, %v360
    %v373 = vshrl.u32 920167782, %v361
    %v374 = vor.u32 %v372, %v373
    %v375 = vshll.u32 920167782, %v360
    %v376 = vshrl.u32 1326507024, %v361
    %v377 = vor.u32 %v375, %v376
    %vm378 = vcmp.lt.s32.totalorder %v359, 1
    %vm379 = vcmp.lt.s32.totalorder %v359, 2
    %vm380 = vcmp.lt.s32.totalorder %v359, 3
    %vm381 = vcmp.lt.s32.totalorder %v359, 4
    %v382 = vsel %vm378, %v362, %v365
    %v383 = vsel %vm381, %v371, 2102212464
    %v384 = vsel %vm380, %v368, %v383
    %v385 = vsel %vm379, %v382, %v384
    %v386 = vsel %vm378, %v365, %v368
    %v387 = vsel %vm381, %v374, 920167782
    %v388 = vsel %vm380, %v371, %v387
    %v389 = vsel %vm379, %v386, %v388
    %v390 = vsel %vm378, %v368, %v371
    %v391 = vsel %vm381, %v377, 1326507024
    %v392 = vsel %vm380, %v374, %v391
    %v393 = vsel %vm379, %v390, %v392
    %v394 = vshll.u32 %v354, 8
    %v395 = vmul.u32.u64.compose %v394, %v393
    %v396 = vextract.low.u32 %v395
    %v397 = vextract.high.u32 %v395
    %v398 = vmul.u32.u64.compose %v394, %v389
    %v399 = vextract.low.u32 %v398
    %v400 = vextract.high.u32 %v398
    %v401 = vmul.u32 %v394, %v385
    %v402 = vadd.s32 %v397, %v399
    %vm403 = vc.u32 %v397, %v399
    %v404 = vadd.s32 %v400, 1
    %v405 = vsel %vm403, %v404, %v400
    %v406 = vadd.s32 %v401, %v405
    %v407 = vadd.s32 %v406, 536870912
    %v408 = vshrl.u32 %v407, 30
    %v409 = vshll.u32 %v408, 30
    %v410 = vsub.s32 %v406, %v409
    %vm411 = vcmp.lt.s32.totalorder %v410, 0
    %v412 = vsub.s32 0, %v410
    %v413 = vsel %vm411, %v412, %v410
    %v414 = vclz %v413
    %v415 = vsub.s32 %v414, 2
    %vm416 = vcmp.gt.s32.totalorder 0, %v415
    %v417 = vsel %vm416, 0, %v415
    %v418 = vsub.s32 32, %v417
    %v419 = vshll.u32 %v410, %v417
    %v420 = vshrl.u32 %v402, %v418
    %v421 = vor.u32 %v419, %v420
    %v422 = vsub.s32 4294967266, %v417
    %v423 = vadd.s32 %v422, 127
    %v424 = vshll.u32 %v423, 23
    %v425 = vor.u32 4788187, %v424
    %v426 = vand.u32 2147483647, %v425
    %v428 = vcvt.s32.f32 %v421
    %v429 = vmul.f32 %v428, %v426
    %v430 = vxor.u32 %v429, 2147483648
    %v431 = vsel %vm348, %v430, %v429
    %v432 = vsub.s32 4, %v408
    %v433 = vsel %vm348, %v432, %v408
    %v434 = vsel %vm347, %v336, %v431
    %v435 = vsel %vm347, 0, %v433
    %v436 = vcosq.f32.pop %v434
    %v437 = vsinq.f32.pop %v434
    %vm438 = vweird.f32 %v336
    %v439 = vand.u32 %v435, 3
    %vm440 = vcmp.lt.s32.totalorder %v439, 2
    %vm441 = vcmp.eq.s32.totalorder %v439, 0
    %v442 = vxor.u32 %v437, 2147483648
    %v443 = vsel %vm441, %v436, %v442
    %vm444 = vcmp.eq.s32.totalorder %v439, 2
    %v445 = vxor.u32 %v436, 2147483648
    %v446 = vsel %vm444, %v445, %v437
    %v447 = vsel %vm440, %v443, %v446
    %v448 = vsel %vm438, nan, %v447
    %v449 = vmul.f32 %v345, %v448
    %v450 = vsel %vm339, %v449, 0.0
    %451 = vadd.xlane.f32.xlu0 %v450
    %v452 = vpop.xlane.xlu0 %451
    %v453 = vmul.f32 %v452, 0.25
    %v454 = vand.u32 2147483647, %v336
    %vm455 = vcmp.le.f32.partialorder %v454, 0.7853982
    %vm456 = vcmp.lt.s32.totalorder %v336, 0
    %v457 = vand.u32 %v336, 2139095040
    %v458 = vshrl.u32 %v457, 23
    %v459 = vsub.s32 %v458, 127
    %v460 = vand.u32 2147483647, %v336
    %v461 = vand.u32 %v460, 8388607
    %v462 = vor.u32 %v461, 8388608
    %v463 = vsub.s32 0, %v462
    %v464 = vadd.s32 %v459, 1
    %vm465 = vcmp.gt.s32.totalorder %v464, 0
    %v466 = vsel %vm465, %v464, 0
    %v467 = vshrl.u32 %v466, 5
    %v468 = vand.u32 %v466, 31
    %v469 = vsub.s32 32, %v468
    %v470 = vshrl.u32 683565275, %v469
    %v471 = vshll.u32 683565275, %v468
    %v472 = vshrl.u32 2475754826, %v469
    %v473 = vor.u32 %v471, %v472
    %v474 = vshll.u32 2475754826, %v468
    %v475 = vshrl.u32 2131351028, %v469
    %v476 = vor.u32 %v474, %v475
    %v477 = vshll.u32 2131351028, %v468
    %v478 = vshrl.u32 2102212464, %v469
    %v479 = vor.u32 %v477, %v478
    %v480 = vshll.u32 2102212464, %v468
    %v481 = vshrl.u32 920167782, %v469
    %v482 = vor.u32 %v480, %v481
    %v483 = vshll.u32 920167782, %v468
    %v484 = vshrl.u32 1326507024, %v469
    %v485 = vor.u32 %v483, %v484
    %vm486 = vcmp.lt.s32.totalorder %v467, 1
    %vm487 = vcmp.lt.s32.totalorder %v467, 2
    %vm488 = vcmp.lt.s32.totalorder %v467, 3
    %vm489 = vcmp.lt.s32.totalorder %v467, 4
    %v490 = vsel %vm486, %v470, %v473
    %v491 = vsel %vm489, %v479, 2102212464
    %v492 = vsel %vm488, %v476, %v491
    %v493 = vsel %vm487, %v490, %v492
    %v494 = vsel %vm486, %v473, %v476
    %v495 = vsel %vm489, %v482, 920167782
    %v496 = vsel %vm488, %v479, %v495
    %v497 = vsel %vm487, %v494, %v496
    %v498 = vsel %vm486, %v476, %v479
    %v499 = vsel %vm489, %v485, 1326507024
    %v500 = vsel %vm488, %v482, %v499
    %v501 = vsel %vm487, %v498, %v500
    %v502 = vshll.u32 %v462, 8
    %v503 = vmul.u32.u64.compose %v502, %v501
    %v504 = vextract.low.u32 %v503
    %v505 = vextract.high.u32 %v503
    %v506 = vmul.u32.u64.compose %v502, %v497
    %v507 = vextract.low.u32 %v506
    %v508 = vextract.high.u32 %v506
    %v509 = vmul.u32 %v502, %v493
    %v510 = vadd.s32 %v505, %v507
    %vm511 = vc.u32 %v505, %v507
    %v512 = vadd.s32 %v508, 1
    %v513 = vsel %vm511, %v512, %v508
    %v514 = vadd.s32 %v509, %v513
    %v515 = vadd.s32 %v514, 536870912
    %v516 = vshrl.u32 %v515, 30
    %v517 = vshll.u32 %v516, 30
    %v518 = vsub.s32 %v514, %v517
    %vm519 = vcmp.lt.s32.totalorder %v518, 0
    %v520 = vsub.s32 0, %v518
    %v521 = vsel %vm519, %v520, %v518
    %v522 = vclz %v521
    %v523 = vsub.s32 %v522, 2
    %vm524 = vcmp.gt.s32.totalorder 0, %v523
    %v525 = vsel %vm524, 0, %v523
    %v526 = vsub.s32 32, %v525
    %v527 = vshll.u32 %v518, %v525
    %v528 = vshrl.u32 %v510, %v526
    %v529 = vor.u32 %v527, %v528
    %v530 = vsub.s32 4294967266, %v525
    %v531 = vadd.s32 %v530, 127
    %v532 = vshll.u32 %v531, 23
    %v533 = vor.u32 4788187, %v532
    %v534 = vand.u32 2147483647, %v533
    %v536 = vcvt.s32.f32 %v529
    %v537 = vmul.f32 %v536, %v534
    %v538 = vxor.u32 %v537, 2147483648
    %v539 = vsel %vm456, %v538, %v537
    %v540 = vsub.s32 4, %v516
    %v541 = vsel %vm456, %v540, %v516
    %v542 = vsel %vm455, %v336, %v539
    %v543 = vsel %vm455, 0, %v541
    %v544 = vcosq.f32.pop %v542
    %v545 = vsinq.f32.pop %v542
    %vm546 = vweird.f32 %v336
    %v547 = vadd.s32 %v543, 3
    %v548 = vand.u32 %v547, 3
    %vm549 = vcmp.lt.s32.totalorder %v548, 2
    %vm550 = vcmp.eq.s32.totalorder %v548, 0
    %v551 = vxor.u32 %v545, 2147483648
    %v552 = vsel %vm550, %v544, %v551
    %vm553 = vcmp.eq.s32.totalorder %v548, 2
    %v554 = vxor.u32 %v544, 2147483648
    %v555 = vsel %vm553, %v554, %v545
    %v556 = vsel %vm549, %v552, %v555
    %v557 = vsel %vm546, nan, %v556
    %v558 = vmul.f32 %v345, %v557
    %v559 = vsel %vm339, %v558, 0.0
    %560 = vadd.xlane.f32.xlu0 %v559
    %v561 = vpop.xlane.xlu0 %560
    %v562 = vmul.f32 %v561, 0.25
    %v563 = vmul.f32 %v453, %v453
    %v564 = vmul.f32 %v562, %v562
    %v565 = vadd.f32 %v563, %v564
    %v566 = vlog2.pop %v565
    %v567 = vmul.f32 %v566, 0.6931472
    %v568 = vmul.f32 %v567, 0.5
    %v569 = vadd.f32 %v342, %v568
    %vm570 = vcmask 7168
    %v571 = vsel %vm570, %v569, %v453
    %vm572 = vcmask 15360
    %v573 = vsel %vm572, %v571, %v562
    %vm574 = vcmask 23552
    %575 = vst.msk [vmem:[%s7] sm:$0xff] %vm574, %v573
    // Predicated region
    $region42: #{forward_batch.1} parent=1 // pred_check
      _
    $region43: #{forward_batch.1} parent=1 // pred_check_branch
      %577 = sbr.rel (0) target = $region45
    $region44: #{forward_batch.1} parent=1 // pred_region
      _
    $region45: #{forward_batch.1} parent=1 // pred_fallthru
      _
    // Predicated region
    $region46: #{forward_batch.1} parent=1 // pred_check
      _
    $region47: #{forward_batch.1} parent=1 // pred_check_branch
      %579 = sbr.rel (0) target = $region49
    $region48: #{forward_batch.1} parent=1 // pred_region
      _
    $region49: #{forward_batch.1} parent=1 // pred_fallthru
      _
    %580 = vsyncpa [#allocation3], 1
    %581 = vsyncpa [#allocation5], 1

</llo_original>
